<compile_context>
chip_gen: v7x
topology: tpu7x:2x2x1
jax: 0.10.0
libtpu: 0.0.40
codegen_flags: <defaults>
</compile_context>

<pallas_src>
import jax
import jax.numpy as jnp
from jax import lax
from jax.experimental import pallas as pl
from jax.experimental.pallas import tpu as pltpu

NOISE_DIM = 2
HIDDEN = 16
OUT_DIM = 2

_LANES = 128
_SUBLANES = 8
_ROW_BATCH = _LANES // NOISE_DIM      # 64 batch elements per 128-lane row
_MAX_TILE_ROWS = 2048                  # 1 MiB f32 block: VMEM-safe on v5e/v6e/v7x


def _round_up(n, m):
    return ((n + m - 1) // m) * m


def _pair_shuffle_matrices():
    """(128,128) 0/1 matrices PA, PB such that, for a lane-interleaved row X,
    (X @ PA)[:, l] = X[:, l & ~1]  (feature 0 of lane l's batch element) and
    (X @ PB)[:, l] = X[:, l |  1]  (feature 1 of lane l's batch element)."""
    src = jnp.arange(_LANES, dtype=jnp.int32)[:, None]
    dst = jnp.arange(_LANES, dtype=jnp.int32)[None, :]
    pa = (src == (dst & ~1)).astype(jnp.float32)
    pb = (src == (dst | 1)).astype(jnp.float32)
    return pa, pb


def generator_kernel(x_ref, pa_ref, pb_ref, w1_ref, b1_ref, w2_ref, b2_ref,
                     o_ref):
    """One (TR, 128) batch tile of the fused MLP in lane-interleaved layout.

    Shapes:
      x_ref  : (TR, 128) f32   lane 2k = x[b,0], lane 2k+1 = x[b,1]
      pa_ref : (128, 128) f32  pair-select matrix (feature 0)
      pb_ref : (128, 128) f32  pair-select matrix (feature 1)
      w1_ref : (HIDDEN, NOISE_DIM) f32 in SMEM   (PyTorch (out, in) layout)
      b1_ref : (HIDDEN,)  f32 in SMEM
      w2_ref : (OUT_DIM, HIDDEN) f32 in SMEM
      b2_ref : (OUT_DIM,) f32 in SMEM
      o_ref  : (TR, 128) f32   lane 2k = y[b,0], lane 2k+1 = y[b,1]
    """
    x = x_ref[...]

    # De-interleave the lane pairs on the (otherwise idle) MXU: at *every*
    # lane, `a` holds that lane's batch-element x0 and `b` holds its x1.
    # The 0/1 matrices make this exact in f32.
    a = jnp.dot(x, pa_ref[...], preferred_element_type=jnp.float32)
    b = jnp.dot(x, pb_ref[...], preferred_element_type=jnp.float32)

    # Fused MLP on the VPU, one independent pipeline per lane.  Layer-1
    # weights/bias and layer-2 weights are scalars from SMEM (no vreg
    # broadcasts re-materialized per iteration).
    acc0 = jnp.zeros_like(x)   # y[..., 0] contribution at every lane
    acc1 = jnp.zeros_like(x)   # y[..., 1] contribution at every lane
    for j in range(HIDDEN):    # static unroll (16)
        pre = a * w1_ref[j, 0] + b * w1_ref[j, 1] + b1_ref[j]
        h = jnp.maximum(pre, 0.0)
        acc0 = acc0 + h * w2_ref[0, j]
        acc1 = acc1 + h * w2_ref[1, j]
    acc0 = acc0 + b2_ref[0]
    acc1 = acc1 + b2_ref[1]

    # Even lanes carry output feature 0, odd lanes feature 1 (same layout the
    # natural row-major (B, 2) output expects) -> fully dense 128-lane store.
    lane = lax.broadcasted_iota(jnp.int32, x.shape, 1)
    o_ref[...] = jnp.where(lane % 2 == 0, acc0, acc1).astype(o_ref.dtype)


def generator_forward(x, w1, b1, w2, b2, *, block_b=65536, core_parallel=False,
                      vmem_limit_bytes=None):
    """Forward pass of Generator (ReLU MLP 2 -> 16 -> 2).

    Arguments use PyTorch nn.Linear layouts:
      x  : (B, NOISE_DIM)
      w1 : (HIDDEN, NOISE_DIM), b1 : (HIDDEN,)
      w2 : (OUT_DIM, HIDDEN),   b2 : (OUT_DIM,)
    Returns (B, OUT_DIM) in x.dtype (internal compute is float32).

    block_b: batch elements per grid step (rounded to 512; default 65536
    amortizes the ~0.35 us per-step pipeline overhead while staying far under
    every generation's scoped VMEM, including v7x's 64 MiB).
    core_parallel: emit pltpu.CORE_PARALLEL on the batch axis (v7x, 2 TCs).
    """
    B, nd = x.shape
    assert nd == NOISE_DIM
    orig_dtype = x.dtype

    # ---- balanced, lane-aligned batch tiling (rows of 64 batch elems) -----
    rows_needed = _round_up(pl.cdiv(B, _ROW_BATCH), _SUBLANES)
    rows_cap = _round_up(max(block_b, _ROW_BATCH * _SUBLANES) // _ROW_BATCH,
                         _SUBLANES)
    rows_cap = max(_SUBLANES, min(rows_cap, _MAX_TILE_ROWS))
    if rows_needed <= rows_cap:
        tile_rows, n_steps = rows_needed, 1
    else:
        n_steps = pl.cdiv(rows_needed, rows_cap)
        tile_rows = _round_up(pl.cdiv(rows_needed, n_steps), _SUBLANES)
    rows_padded = n_steps * tile_rows          # padding bounded well below a tile
    bp = rows_padded * _ROW_BATCH

    # ---- free, layout-preserving views (no HBM transpose passes) ----------
    xf = x.astype(jnp.float32)
    if bp != B:
        xf = jnp.pad(xf, ((0, bp - B), (0, 0)))        # contiguous pad only
    x_rows = xf.reshape(rows_padded, _LANES)            # row-major bitcast view

    pa, pb = _pair_shuffle_matrices()
    w1c = w1.astype(jnp.float32)                         # (HIDDEN, NOISE_DIM)
    b1c = b1.reshape(HIDDEN).astype(jnp.float32)
    w2c = w2.astype(jnp.float32)                         # (OUT_DIM, HIDDEN)
    b2c = b2.reshape(OUT_DIM).astype(jnp.float32)

    batch_sem = pltpu.CORE_PARALLEL if core_parallel else "parallel"

    y_rows = pl.pallas_call(
        generator_kernel,
        out_shape=jax.ShapeDtypeStruct((rows_padded, _LANES), jnp.float32),
        grid=(n_steps,),
        in_specs=[
            pl.BlockSpec((tile_rows, _LANES), lambda i: (i, 0)),
            pl.BlockSpec((_LANES, _LANES), lambda i: (0, 0)),   # PA, VMEM-resident
            pl.BlockSpec((_LANES, _LANES), lambda i: (0, 0)),   # PB, VMEM-resident
            pl.BlockSpec(memory_space=pltpu.MemorySpace.SMEM),  # w1
            pl.BlockSpec(memory_space=pltpu.MemorySpace.SMEM),  # b1
            pl.BlockSpec(memory_space=pltpu.MemorySpace.SMEM),  # w2
            pl.BlockSpec(memory_space=pltpu.MemorySpace.SMEM),  # b2
        ],
        out_specs=pl.BlockSpec((tile_rows, _LANES), lambda i: (i, 0)),
        compiler_params=pltpu.CompilerParams(
            dimension_semantics=(batch_sem,),
            vmem_limit_bytes=vmem_limit_bytes),
    )(x_rows, pa, pb, w1c, b1c, w2c, b2c)

    y = y_rows.reshape(bp, OUT_DIM)                      # free reshape back
    if bp != B:
        y = y[:B]
    return y.astype(orig_dtype)


def init_params(key):
    """Deterministic init mirroring nn.Linear's uniform(-1/sqrt(fan_in), +)
    bounds, in native PyTorch layouts (out_features, in_features)."""
    k1, k2, k3, k4 = jax.random.split(key, 4)
    bound1 = 1.0 / jnp.sqrt(float(NOISE_DIM))
    bound2 = 1.0 / jnp.sqrt(float(HIDDEN))
    w1 = jax.random.uniform(k1, (HIDDEN, NOISE_DIM), jnp.float32, -bound1, bound1)
    b1 = jax.random.uniform(k2, (HIDDEN,), jnp.float32, -bound1, bound1)
    w2 = jax.random.uniform(k3, (OUT_DIM, HIDDEN), jnp.float32, -bound2, bound2)
    b2 = jax.random.uniform(k4, (OUT_DIM,), jnp.float32, -bound2, bound2)
    return w1, b1, w2, b2


def _reference(x, w1, b1, w2, b2):
    # Same math as the PyTorch forward: x @ W1.T + b1 -> ReLU -> @ W2.T + b2.
    return jnp.maximum(x @ w1.T + b1, 0.0) @ w2.T + b2


if __name__ == "__main__":
    key = jax.random.PRNGKey(0)
    kx, kx2, kp = jax.random.split(key, 3)
    w1, b1, w2, b2 = init_params(kp)
    fwd = jax.jit(generator_forward)

    # Small batch (single grid step, heavy padding path).
    batch = 8
    x = jax.random.normal(kx, (batch, NOISE_DIM), dtype=jnp.float32)
    out = fwd(x, w1, b1, w2, b2)
    jax.block_until_ready(out)
    ref = _reference(x, w1, b1, w2, b2)
    assert out.shape == (batch, OUT_DIM)
    assert jnp.allclose(out, ref, atol=1e-5, rtol=1e-5)

    # Non-aligned batch forcing multiple grid steps + tail padding.
    batch2 = 1500
    x2 = jax.random.normal(kx2, (batch2, NOISE_DIM), dtype=jnp.float32)
    out2 = generator_forward(x2, w1, b1, w2, b2, block_b=512)
    jax.block_until_ready(out2)
    ref2 = _reference(x2, w1, b1, w2, b2)
    assert out2.shape == (batch2, OUT_DIM)
    assert jnp.allclose(out2, ref2, atol=1e-5, rtol=1e-5)

    print("KERNEL_OK")
</pallas_src>

<mosaic_0001>
module attributes {stable_mosaic.version = 11 : i64} {
  func.func @generator_kernel(%arg0: i32, %arg1: memref<8x128xf32, #tpu.memory_space<vmem>>, %arg2: memref<128x128xf32, #tpu.memory_space<vmem>>, %arg3: memref<128x128xf32, #tpu.memory_space<vmem>>, %arg4: memref<16x2xf32, #tpu.memory_space<smem>>, %arg5: memref<16xf32, #tpu.memory_space<smem>>, %arg6: memref<2x16xf32, #tpu.memory_space<smem>>, %arg7: memref<2xf32, #tpu.memory_space<smem>>, %arg8: memref<8x128xf32, #tpu.memory_space<vmem>>) attributes {dimension_semantics = [#tpu.dimension_semantics<parallel>], iteration_bounds = array<i64: 1>, scalar_prefetch = 0 : i64, scratch_operands = 0 : i64, tpu.core_type = #tpu.core_type<tc>, window_params = [{transform_indices = @transform_0, window_bounds = array<i64: 8, 128>}, {pipeline_mode = #tpu.pipeline_mode<synchronous>, transform_indices = @transform_1, window_bounds = array<i64: 128, 128>}, {pipeline_mode = #tpu.pipeline_mode<synchronous>, transform_indices = @transform_2, window_bounds = array<i64: 128, 128>}, {transform_indices = @transform_3, window_bounds = array<i64: 16, 2>}, {transform_indices = @transform_4, window_bounds = array<i64: 16>}, {transform_indices = @transform_5, window_bounds = array<i64: 2, 16>}, {transform_indices = @transform_6, window_bounds = array<i64: 2>}, {transform_indices = @transform_7, window_bounds = array<i64: 8, 128>}]} {
    %c0 = arith.constant 0 : index
    %c0_0 = arith.constant 0 : index
    %0 = vector.load %arg1[%c0, %c0_0] : memref<8x128xf32, #tpu.memory_space<vmem>>, vector<8x128xf32>
    %c0_1 = arith.constant 0 : index
    %c0_2 = arith.constant 0 : index
    %1 = vector.load %arg2[%c0_1, %c0_2] : memref<128x128xf32, #tpu.memory_space<vmem>>, vector<128x128xf32>
    %cst = arith.constant dense<0.000000e+00> : vector<8x128xf32>
    %2 = tpu.matmul %0, %1, %cst {dimension_numbers = #tpu.dot_dimension_numbers<[1], [0], [0], [1], [0, 0, 1, 1], [], []>} : vector<8x128xf32>, vector<128x128xf32>, vector<8x128xf32> -> vector<8x128xf32>
    %c0_3 = arith.constant 0 : index
    %c0_4 = arith.constant 0 : index
    %3 = vector.load %arg3[%c0_3, %c0_4] : memref<128x128xf32, #tpu.memory_space<vmem>>, vector<128x128xf32>
    %cst_5 = arith.constant dense<0.000000e+00> : vector<8x128xf32>
    %4 = tpu.matmul %0, %3, %cst_5 {dimension_numbers = #tpu.dot_dimension_numbers<[1], [0], [0], [1], [0, 0, 1, 1], [], []>} : vector<8x128xf32>, vector<128x128xf32>, vector<8x128xf32> -> vector<8x128xf32>
    %cst_6 = arith.constant 0.000000e+00 : f32
    %5 = vector.broadcast %cst_6 : f32 to vector<8x128xf32>
    %cst_7 = arith.constant 0.000000e+00 : f32
    %6 = vector.broadcast %cst_7 : f32 to vector<8x128xf32>
    %c0_8 = arith.constant 0 : index
    %c0_9 = arith.constant 0 : index
    %7 = memref.load %arg4[%c0_8, %c0_9] : memref<16x2xf32, #tpu.memory_space<smem>>
    %8 = vector.broadcast %7 : f32 to vector<8x128xf32>
    %9 = arith.mulf %2, %8 : vector<8x128xf32>
    %c0_10 = arith.constant 0 : index
    %c1 = arith.constant 1 : index
    %10 = memref.load %arg4[%c0_10, %c1] : memref<16x2xf32, #tpu.memory_space<smem>>
    %11 = vector.broadcast %10 : f32 to vector<8x128xf32>
    %12 = arith.mulf %4, %11 : vector<8x128xf32>
    %13 = arith.addf %9, %12 : vector<8x128xf32>
    %c0_11 = arith.constant 0 : index
    %14 = memref.load %arg5[%c0_11] : memref<16xf32, #tpu.memory_space<smem>>
    %15 = vector.broadcast %14 : f32 to vector<8x128xf32>
    %16 = arith.addf %13, %15 : vector<8x128xf32>
    %cst_12 = arith.constant 0.000000e+00 : f32
    %17 = vector.broadcast %cst_12 : f32 to vector<8x128xf32>
    %18 = arith.maximumf %16, %17 : vector<8x128xf32>
    %c0_13 = arith.constant 0 : index
    %c0_14 = arith.constant 0 : index
    %19 = memref.load %arg6[%c0_13, %c0_14] : memref<2x16xf32, #tpu.memory_space<smem>>
    %20 = vector.broadcast %19 : f32 to vector<8x128xf32>
    %21 = arith.mulf %18, %20 : vector<8x128xf32>
    %22 = arith.addf %5, %21 : vector<8x128xf32>
    %c1_15 = arith.constant 1 : index
    %c0_16 = arith.constant 0 : index
    %23 = memref.load %arg6[%c1_15, %c0_16] : memref<2x16xf32, #tpu.memory_space<smem>>
    %24 = vector.broadcast %23 : f32 to vector<8x128xf32>
    %25 = arith.mulf %18, %24 : vector<8x128xf32>
    %26 = arith.addf %6, %25 : vector<8x128xf32>
    %c1_17 = arith.constant 1 : index
    %c0_18 = arith.constant 0 : index
    %27 = memref.load %arg4[%c1_17, %c0_18] : memref<16x2xf32, #tpu.memory_space<smem>>
    %28 = vector.broadcast %27 : f32 to vector<8x128xf32>
    %29 = arith.mulf %2, %28 : vector<8x128xf32>
    %c1_19 = arith.constant 1 : index
    %c1_20 = arith.constant 1 : index
    %30 = memref.load %arg4[%c1_19, %c1_20] : memref<16x2xf32, #tpu.memory_space<smem>>
    %31 = vector.broadcast %30 : f32 to vector<8x128xf32>
    %32 = arith.mulf %4, %31 : vector<8x128xf32>
    %33 = arith.addf %29, %32 : vector<8x128xf32>
    %c1_21 = arith.constant 1 : index
    %34 = memref.load %arg5[%c1_21] : memref<16xf32, #tpu.memory_space<smem>>
    %35 = vector.broadcast %34 : f32 to vector<8x128xf32>
    %36 = arith.addf %33, %35 : vector<8x128xf32>
    %cst_22 = arith.constant 0.000000e+00 : f32
    %37 = vector.broadcast %cst_22 : f32 to vector<8x128xf32>
    %38 = arith.maximumf %36, %37 : vector<8x128xf32>
    %c0_23 = arith.constant 0 : index
    %c1_24 = arith.constant 1 : index
    %39 = memref.load %arg6[%c0_23, %c1_24] : memref<2x16xf32, #tpu.memory_space<smem>>
    %40 = vector.broadcast %39 : f32 to vector<8x128xf32>
    %41 = arith.mulf %38, %40 : vector<8x128xf32>
    %42 = arith.addf %22, %41 : vector<8x128xf32>
    %c1_25 = arith.constant 1 : index
    %c1_26 = arith.constant 1 : index
    %43 = memref.load %arg6[%c1_25, %c1_26] : memref<2x16xf32, #tpu.memory_space<smem>>
    %44 = vector.broadcast %43 : f32 to vector<8x128xf32>
    %45 = arith.mulf %38, %44 : vector<8x128xf32>
    %46 = arith.addf %26, %45 : vector<8x128xf32>
    %c2 = arith.constant 2 : index
    %c0_27 = arith.constant 0 : index
    %47 = memref.load %arg4[%c2, %c0_27] : memref<16x2xf32, #tpu.memory_space<smem>>
    %48 = vector.broadcast %47 : f32 to vector<8x128xf32>
    %49 = arith.mulf %2, %48 : vector<8x128xf32>
    %c2_28 = arith.constant 2 : index
    %c1_29 = arith.constant 1 : index
    %50 = memref.load %arg4[%c2_28, %c1_29] : memref<16x2xf32, #tpu.memory_space<smem>>
    %51 = vector.broadcast %50 : f32 to vector<8x128xf32>
    %52 = arith.mulf %4, %51 : vector<8x128xf32>
    %53 = arith.addf %49, %52 : vector<8x128xf32>
    %c2_30 = arith.constant 2 : index
    %54 = memref.load %arg5[%c2_30] : memref<16xf32, #tpu.memory_space<smem>>
    %55 = vector.broadcast %54 : f32 to vector<8x128xf32>
    %56 = arith.addf %53, %55 : vector<8x128xf32>
    %cst_31 = arith.constant 0.000000e+00 : f32
    %57 = vector.broadcast %cst_31 : f32 to vector<8x128xf32>
    %58 = arith.maximumf %56, %57 : vector<8x128xf32>
    %c0_32 = arith.constant 0 : index
    %c2_33 = arith.constant 2 : index
    %59 = memref.load %arg6[%c0_32, %c2_33] : memref<2x16xf32, #tpu.memory_space<smem>>
    %60 = vector.broadcast %59 : f32 to vector<8x128xf32>
    %61 = arith.mulf %58, %60 : vector<8x128xf32>
    %62 = arith.addf %42, %61 : vector<8x128xf32>
    %c1_34 = arith.constant 1 : index
    %c2_35 = arith.constant 2 : index
    %63 = memref.load %arg6[%c1_34, %c2_35] : memref<2x16xf32, #tpu.memory_space<smem>>
    %64 = vector.broadcast %63 : f32 to vector<8x128xf32>
    %65 = arith.mulf %58, %64 : vector<8x128xf32>
    %66 = arith.addf %46, %65 : vector<8x128xf32>
    %c3 = arith.constant 3 : index
    %c0_36 = arith.constant 0 : index
    %67 = memref.load %arg4[%c3, %c0_36] : memref<16x2xf32, #tpu.memory_space<smem>>
    %68 = vector.broadcast %67 : f32 to vector<8x128xf32>
    %69 = arith.mulf %2, %68 : vector<8x128xf32>
    %c3_37 = arith.constant 3 : index
    %c1_38 = arith.constant 1 : index
    %70 = memref.load %arg4[%c3_37, %c1_38] : memref<16x2xf32, #tpu.memory_space<smem>>
    %71 = vector.broadcast %70 : f32 to vector<8x128xf32>
    %72 = arith.mulf %4, %71 : vector<8x128xf32>
    %73 = arith.addf %69, %72 : vector<8x128xf32>
    %c3_39 = arith.constant 3 : index
    %74 = memref.load %arg5[%c3_39] : memref<16xf32, #tpu.memory_space<smem>>
    %75 = vector.broadcast %74 : f32 to vector<8x128xf32>
    %76 = arith.addf %73, %75 : vector<8x128xf32>
    %cst_40 = arith.constant 0.000000e+00 : f32
    %77 = vector.broadcast %cst_40 : f32 to vector<8x128xf32>
    %78 = arith.maximumf %76, %77 : vector<8x128xf32>
    %c0_41 = arith.constant 0 : index
    %c3_42 = arith.constant 3 : index
    %79 = memref.load %arg6[%c0_41, %c3_42] : memref<2x16xf32, #tpu.memory_space<smem>>
    %80 = vector.broadcast %79 : f32 to vector<8x128xf32>
    %81 = arith.mulf %78, %80 : vector<8x128xf32>
    %82 = arith.addf %62, %81 : vector<8x128xf32>
    %c1_43 = arith.constant 1 : index
    %c3_44 = arith.constant 3 : index
    %83 = memref.load %arg6[%c1_43, %c3_44] : memref<2x16xf32, #tpu.memory_space<smem>>
    %84 = vector.broadcast %83 : f32 to vector<8x128xf32>
    %85 = arith.mulf %78, %84 : vector<8x128xf32>
    %86 = arith.addf %66, %85 : vector<8x128xf32>
    %c4 = arith.constant 4 : index
    %c0_45 = arith.constant 0 : index
    %87 = memref.load %arg4[%c4, %c0_45] : memref<16x2xf32, #tpu.memory_space<smem>>
    %88 = vector.broadcast %87 : f32 to vector<8x128xf32>
    %89 = arith.mulf %2, %88 : vector<8x128xf32>
    %c4_46 = arith.constant 4 : index
    %c1_47 = arith.constant 1 : index
    %90 = memref.load %arg4[%c4_46, %c1_47] : memref<16x2xf32, #tpu.memory_space<smem>>
    %91 = vector.broadcast %90 : f32 to vector<8x128xf32>
    %92 = arith.mulf %4, %91 : vector<8x128xf32>
    %93 = arith.addf %89, %92 : vector<8x128xf32>
    %c4_48 = arith.constant 4 : index
    %94 = memref.load %arg5[%c4_48] : memref<16xf32, #tpu.memory_space<smem>>
    %95 = vector.broadcast %94 : f32 to vector<8x128xf32>
    %96 = arith.addf %93, %95 : vector<8x128xf32>
    %cst_49 = arith.constant 0.000000e+00 : f32
    %97 = vector.broadcast %cst_49 : f32 to vector<8x128xf32>
    %98 = arith.maximumf %96, %97 : vector<8x128xf32>
    %c0_50 = arith.constant 0 : index
    %c4_51 = arith.constant 4 : index
    %99 = memref.load %arg6[%c0_50, %c4_51] : memref<2x16xf32, #tpu.memory_space<smem>>
    %100 = vector.broadcast %99 : f32 to vector<8x128xf32>
    %101 = arith.mulf %98, %100 : vector<8x128xf32>
    %102 = arith.addf %82, %101 : vector<8x128xf32>
    %c1_52 = arith.constant 1 : index
    %c4_53 = arith.constant 4 : index
    %103 = memref.load %arg6[%c1_52, %c4_53] : memref<2x16xf32, #tpu.memory_space<smem>>
    %104 = vector.broadcast %103 : f32 to vector<8x128xf32>
    %105 = arith.mulf %98, %104 : vector<8x128xf32>
    %106 = arith.addf %86, %105 : vector<8x128xf32>
    %c5 = arith.constant 5 : index
    %c0_54 = arith.constant 0 : index
    %107 = memref.load %arg4[%c5, %c0_54] : memref<16x2xf32, #tpu.memory_space<smem>>
    %108 = vector.broadcast %107 : f32 to vector<8x128xf32>
    %109 = arith.mulf %2, %108 : vector<8x128xf32>
    %c5_55 = arith.constant 5 : index
    %c1_56 = arith.constant 1 : index
    %110 = memref.load %arg4[%c5_55, %c1_56] : memref<16x2xf32, #tpu.memory_space<smem>>
    %111 = vector.broadcast %110 : f32 to vector<8x128xf32>
    %112 = arith.mulf %4, %111 : vector<8x128xf32>
    %113 = arith.addf %109, %112 : vector<8x128xf32>
    %c5_57 = arith.constant 5 : index
    %114 = memref.load %arg5[%c5_57] : memref<16xf32, #tpu.memory_space<smem>>
    %115 = vector.broadcast %114 : f32 to vector<8x128xf32>
    %116 = arith.addf %113, %115 : vector<8x128xf32>
    %cst_58 = arith.constant 0.000000e+00 : f32
    %117 = vector.broadcast %cst_58 : f32 to vector<8x128xf32>
    %118 = arith.maximumf %116, %117 : vector<8x128xf32>
    %c0_59 = arith.constant 0 : index
    %c5_60 = arith.constant 5 : index
    %119 = memref.load %arg6[%c0_59, %c5_60] : memref<2x16xf32, #tpu.memory_space<smem>>
    %120 = vector.broadcast %119 : f32 to vector<8x128xf32>
    %121 = arith.mulf %118, %120 : vector<8x128xf32>
    %122 = arith.addf %102, %121 : vector<8x128xf32>
    %c1_61 = arith.constant 1 : index
    %c5_62 = arith.constant 5 : index
    %123 = memref.load %arg6[%c1_61, %c5_62] : memref<2x16xf32, #tpu.memory_space<smem>>
    %124 = vector.broadcast %123 : f32 to vector<8x128xf32>
    %125 = arith.mulf %118, %124 : vector<8x128xf32>
    %126 = arith.addf %106, %125 : vector<8x128xf32>
    %c6 = arith.constant 6 : index
    %c0_63 = arith.constant 0 : index
    %127 = memref.load %arg4[%c6, %c0_63] : memref<16x2xf32, #tpu.memory_space<smem>>
    %128 = vector.broadcast %127 : f32 to vector<8x128xf32>
    %129 = arith.mulf %2, %128 : vector<8x128xf32>
    %c6_64 = arith.constant 6 : index
    %c1_65 = arith.constant 1 : index
    %130 = memref.load %arg4[%c6_64, %c1_65] : memref<16x2xf32, #tpu.memory_space<smem>>
    %131 = vector.broadcast %130 : f32 to vector<8x128xf32>
    %132 = arith.mulf %4, %131 : vector<8x128xf32>
    %133 = arith.addf %129, %132 : vector<8x128xf32>
    %c6_66 = arith.constant 6 : index
    %134 = memref.load %arg5[%c6_66] : memref<16xf32, #tpu.memory_space<smem>>
    %135 = vector.broadcast %134 : f32 to vector<8x128xf32>
    %136 = arith.addf %133, %135 : vector<8x128xf32>
    %cst_67 = arith.constant 0.000000e+00 : f32
    %137 = vector.broadcast %cst_67 : f32 to vector<8x128xf32>
    %138 = arith.maximumf %136, %137 : vector<8x128xf32>
    %c0_68 = arith.constant 0 : index
    %c6_69 = arith.constant 6 : index
    %139 = memref.load %arg6[%c0_68, %c6_69] : memref<2x16xf32, #tpu.memory_space<smem>>
    %140 = vector.broadcast %139 : f32 to vector<8x128xf32>
    %141 = arith.mulf %138, %140 : vector<8x128xf32>
    %142 = arith.addf %122, %141 : vector<8x128xf32>
    %c1_70 = arith.constant 1 : index
    %c6_71 = arith.constant 6 : index
    %143 = memref.load %arg6[%c1_70, %c6_71] : memref<2x16xf32, #tpu.memory_space<smem>>
    %144 = vector.broadcast %143 : f32 to vector<8x128xf32>
    %145 = arith.mulf %138, %144 : vector<8x128xf32>
    %146 = arith.addf %126, %145 : vector<8x128xf32>
    %c7 = arith.constant 7 : index
    %c0_72 = arith.constant 0 : index
    %147 = memref.load %arg4[%c7, %c0_72] : memref<16x2xf32, #tpu.memory_space<smem>>
    %148 = vector.broadcast %147 : f32 to vector<8x128xf32>
    %149 = arith.mulf %2, %148 : vector<8x128xf32>
    %c7_73 = arith.constant 7 : index
    %c1_74 = arith.constant 1 : index
    %150 = memref.load %arg4[%c7_73, %c1_74] : memref<16x2xf32, #tpu.memory_space<smem>>
    %151 = vector.broadcast %150 : f32 to vector<8x128xf32>
    %152 = arith.mulf %4, %151 : vector<8x128xf32>
    %153 = arith.addf %149, %152 : vector<8x128xf32>
    %c7_75 = arith.constant 7 : index
    %154 = memref.load %arg5[%c7_75] : memref<16xf32, #tpu.memory_space<smem>>
    %155 = vector.broadcast %154 : f32 to vector<8x128xf32>
    %156 = arith.addf %153, %155 : vector<8x128xf32>
    %cst_76 = arith.constant 0.000000e+00 : f32
    %157 = vector.broadcast %cst_76 : f32 to vector<8x128xf32>
    %158 = arith.maximumf %156, %157 : vector<8x128xf32>
    %c0_77 = arith.constant 0 : index
    %c7_78 = arith.constant 7 : index
    %159 = memref.load %arg6[%c0_77, %c7_78] : memref<2x16xf32, #tpu.memory_space<smem>>
    %160 = vector.broadcast %159 : f32 to vector<8x128xf32>
    %161 = arith.mulf %158, %160 : vector<8x128xf32>
    %162 = arith.addf %142, %161 : vector<8x128xf32>
    %c1_79 = arith.constant 1 : index
    %c7_80 = arith.constant 7 : index
    %163 = memref.load %arg6[%c1_79, %c7_80] : memref<2x16xf32, #tpu.memory_space<smem>>
    %164 = vector.broadcast %163 : f32 to vector<8x128xf32>
    %165 = arith.mulf %158, %164 : vector<8x128xf32>
    %166 = arith.addf %146, %165 : vector<8x128xf32>
    %c8 = arith.constant 8 : index
    %c0_81 = arith.constant 0 : index
    %167 = memref.load %arg4[%c8, %c0_81] : memref<16x2xf32, #tpu.memory_space<smem>>
    %168 = vector.broadcast %167 : f32 to vector<8x128xf32>
    %169 = arith.mulf %2, %168 : vector<8x128xf32>
    %c8_82 = arith.constant 8 : index
    %c1_83 = arith.constant 1 : index
    %170 = memref.load %arg4[%c8_82, %c1_83] : memref<16x2xf32, #tpu.memory_space<smem>>
    %171 = vector.broadcast %170 : f32 to vector<8x128xf32>
    %172 = arith.mulf %4, %171 : vector<8x128xf32>
    %173 = arith.addf %169, %172 : vector<8x128xf32>
    %c8_84 = arith.constant 8 : index
    %174 = memref.load %arg5[%c8_84] : memref<16xf32, #tpu.memory_space<smem>>
    %175 = vector.broadcast %174 : f32 to vector<8x128xf32>
    %176 = arith.addf %173, %175 : vector<8x128xf32>
    %cst_85 = arith.constant 0.000000e+00 : f32
    %177 = vector.broadcast %cst_85 : f32 to vector<8x128xf32>
    %178 = arith.maximumf %176, %177 : vector<8x128xf32>
    %c0_86 = arith.constant 0 : index
    %c8_87 = arith.constant 8 : index
    %179 = memref.load %arg6[%c0_86, %c8_87] : memref<2x16xf32, #tpu.memory_space<smem>>
    %180 = vector.broadcast %179 : f32 to vector<8x128xf32>
    %181 = arith.mulf %178, %180 : vector<8x128xf32>
    %182 = arith.addf %162, %181 : vector<8x128xf32>
    %c1_88 = arith.constant 1 : index
    %c8_89 = arith.constant 8 : index
    %183 = memref.load %arg6[%c1_88, %c8_89] : memref<2x16xf32, #tpu.memory_space<smem>>
    %184 = vector.broadcast %183 : f32 to vector<8x128xf32>
    %185 = arith.mulf %178, %184 : vector<8x128xf32>
    %186 = arith.addf %166, %185 : vector<8x128xf32>
    %c9 = arith.constant 9 : index
    %c0_90 = arith.constant 0 : index
    %187 = memref.load %arg4[%c9, %c0_90] : memref<16x2xf32, #tpu.memory_space<smem>>
    %188 = vector.broadcast %187 : f32 to vector<8x128xf32>
    %189 = arith.mulf %2, %188 : vector<8x128xf32>
    %c9_91 = arith.constant 9 : index
    %c1_92 = arith.constant 1 : index
    %190 = memref.load %arg4[%c9_91, %c1_92] : memref<16x2xf32, #tpu.memory_space<smem>>
    %191 = vector.broadcast %190 : f32 to vector<8x128xf32>
    %192 = arith.mulf %4, %191 : vector<8x128xf32>
    %193 = arith.addf %189, %192 : vector<8x128xf32>
    %c9_93 = arith.constant 9 : index
    %194 = memref.load %arg5[%c9_93] : memref<16xf32, #tpu.memory_space<smem>>
    %195 = vector.broadcast %194 : f32 to vector<8x128xf32>
    %196 = arith.addf %193, %195 : vector<8x128xf32>
    %cst_94 = arith.constant 0.000000e+00 : f32
    %197 = vector.broadcast %cst_94 : f32 to vector<8x128xf32>
    %198 = arith.maximumf %196, %197 : vector<8x128xf32>
    %c0_95 = arith.constant 0 : index
    %c9_96 = arith.constant 9 : index
    %199 = memref.load %arg6[%c0_95, %c9_96] : memref<2x16xf32, #tpu.memory_space<smem>>
    %200 = vector.broadcast %199 : f32 to vector<8x128xf32>
    %201 = arith.mulf %198, %200 : vector<8x128xf32>
    %202 = arith.addf %182, %201 : vector<8x128xf32>
    %c1_97 = arith.constant 1 : index
    %c9_98 = arith.constant 9 : index
    %203 = memref.load %arg6[%c1_97, %c9_98] : memref<2x16xf32, #tpu.memory_space<smem>>
    %204 = vector.broadcast %203 : f32 to vector<8x128xf32>
    %205 = arith.mulf %198, %204 : vector<8x128xf32>
    %206 = arith.addf %186, %205 : vector<8x128xf32>
    %c10 = arith.constant 10 : index
    %c0_99 = arith.constant 0 : index
    %207 = memref.load %arg4[%c10, %c0_99] : memref<16x2xf32, #tpu.memory_space<smem>>
    %208 = vector.broadcast %207 : f32 to vector<8x128xf32>
    %209 = arith.mulf %2, %208 : vector<8x128xf32>
    %c10_100 = arith.constant 10 : index
    %c1_101 = arith.constant 1 : index
    %210 = memref.load %arg4[%c10_100, %c1_101] : memref<16x2xf32, #tpu.memory_space<smem>>
    %211 = vector.broadcast %210 : f32 to vector<8x128xf32>
    %212 = arith.mulf %4, %211 : vector<8x128xf32>
    %213 = arith.addf %209, %212 : vector<8x128xf32>
    %c10_102 = arith.constant 10 : index
    %214 = memref.load %arg5[%c10_102] : memref<16xf32, #tpu.memory_space<smem>>
    %215 = vector.broadcast %214 : f32 to vector<8x128xf32>
    %216 = arith.addf %213, %215 : vector<8x128xf32>
    %cst_103 = arith.constant 0.000000e+00 : f32
    %217 = vector.broadcast %cst_103 : f32 to vector<8x128xf32>
    %218 = arith.maximumf %216, %217 : vector<8x128xf32>
    %c0_104 = arith.constant 0 : index
    %c10_105 = arith.constant 10 : index
    %219 = memref.load %arg6[%c0_104, %c10_105] : memref<2x16xf32, #tpu.memory_space<smem>>
    %220 = vector.broadcast %219 : f32 to vector<8x128xf32>
    %221 = arith.mulf %218, %220 : vector<8x128xf32>
    %222 = arith.addf %202, %221 : vector<8x128xf32>
    %c1_106 = arith.constant 1 : index
    %c10_107 = arith.constant 10 : index
    %223 = memref.load %arg6[%c1_106, %c10_107] : memref<2x16xf32, #tpu.memory_space<smem>>
    %224 = vector.broadcast %223 : f32 to vector<8x128xf32>
    %225 = arith.mulf %218, %224 : vector<8x128xf32>
    %226 = arith.addf %206, %225 : vector<8x128xf32>
    %c11 = arith.constant 11 : index
    %c0_108 = arith.constant 0 : index
    %227 = memref.load %arg4[%c11, %c0_108] : memref<16x2xf32, #tpu.memory_space<smem>>
    %228 = vector.broadcast %227 : f32 to vector<8x128xf32>
    %229 = arith.mulf %2, %228 : vector<8x128xf32>
    %c11_109 = arith.constant 11 : index
    %c1_110 = arith.constant 1 : index
    %230 = memref.load %arg4[%c11_109, %c1_110] : memref<16x2xf32, #tpu.memory_space<smem>>
    %231 = vector.broadcast %230 : f32 to vector<8x128xf32>
    %232 = arith.mulf %4, %231 : vector<8x128xf32>
    %233 = arith.addf %229, %232 : vector<8x128xf32>
    %c11_111 = arith.constant 11 : index
    %234 = memref.load %arg5[%c11_111] : memref<16xf32, #tpu.memory_space<smem>>
    %235 = vector.broadcast %234 : f32 to vector<8x128xf32>
    %236 = arith.addf %233, %235 : vector<8x128xf32>
    %cst_112 = arith.constant 0.000000e+00 : f32
    %237 = vector.broadcast %cst_112 : f32 to vector<8x128xf32>
    %238 = arith.maximumf %236, %237 : vector<8x128xf32>
    %c0_113 = arith.constant 0 : index
    %c11_114 = arith.constant 11 : index
    %239 = memref.load %arg6[%c0_113, %c11_114] : memref<2x16xf32, #tpu.memory_space<smem>>
    %240 = vector.broadcast %239 : f32 to vector<8x128xf32>
    %241 = arith.mulf %238, %240 : vector<8x128xf32>
    %242 = arith.addf %222, %241 : vector<8x128xf32>
    %c1_115 = arith.constant 1 : index
    %c11_116 = arith.constant 11 : index
    %243 = memref.load %arg6[%c1_115, %c11_116] : memref<2x16xf32, #tpu.memory_space<smem>>
    %244 = vector.broadcast %243 : f32 to vector<8x128xf32>
    %245 = arith.mulf %238, %244 : vector<8x128xf32>
    %246 = arith.addf %226, %245 : vector<8x128xf32>
    %c12 = arith.constant 12 : index
    %c0_117 = arith.constant 0 : index
    %247 = memref.load %arg4[%c12, %c0_117] : memref<16x2xf32, #tpu.memory_space<smem>>
    %248 = vector.broadcast %247 : f32 to vector<8x128xf32>
    %249 = arith.mulf %2, %248 : vector<8x128xf32>
    %c12_118 = arith.constant 12 : index
    %c1_119 = arith.constant 1 : index
    %250 = memref.load %arg4[%c12_118, %c1_119] : memref<16x2xf32, #tpu.memory_space<smem>>
    %251 = vector.broadcast %250 : f32 to vector<8x128xf32>
    %252 = arith.mulf %4, %251 : vector<8x128xf32>
    %253 = arith.addf %249, %252 : vector<8x128xf32>
    %c12_120 = arith.constant 12 : index
    %254 = memref.load %arg5[%c12_120] : memref<16xf32, #tpu.memory_space<smem>>
    %255 = vector.broadcast %254 : f32 to vector<8x128xf32>
    %256 = arith.addf %253, %255 : vector<8x128xf32>
    %cst_121 = arith.constant 0.000000e+00 : f32
    %257 = vector.broadcast %cst_121 : f32 to vector<8x128xf32>
    %258 = arith.maximumf %256, %257 : vector<8x128xf32>
    %c0_122 = arith.constant 0 : index
    %c12_123 = arith.constant 12 : index
    %259 = memref.load %arg6[%c0_122, %c12_123] : memref<2x16xf32, #tpu.memory_space<smem>>
    %260 = vector.broadcast %259 : f32 to vector<8x128xf32>
    %261 = arith.mulf %258, %260 : vector<8x128xf32>
    %262 = arith.addf %242, %261 : vector<8x128xf32>
    %c1_124 = arith.constant 1 : index
    %c12_125 = arith.constant 12 : index
    %263 = memref.load %arg6[%c1_124, %c12_125] : memref<2x16xf32, #tpu.memory_space<smem>>
    %264 = vector.broadcast %263 : f32 to vector<8x128xf32>
    %265 = arith.mulf %258, %264 : vector<8x128xf32>
    %266 = arith.addf %246, %265 : vector<8x128xf32>
    %c13 = arith.constant 13 : index
    %c0_126 = arith.constant 0 : index
    %267 = memref.load %arg4[%c13, %c0_126] : memref<16x2xf32, #tpu.memory_space<smem>>
    %268 = vector.broadcast %267 : f32 to vector<8x128xf32>
    %269 = arith.mulf %2, %268 : vector<8x128xf32>
    %c13_127 = arith.constant 13 : index
    %c1_128 = arith.constant 1 : index
    %270 = memref.load %arg4[%c13_127, %c1_128] : memref<16x2xf32, #tpu.memory_space<smem>>
    %271 = vector.broadcast %270 : f32 to vector<8x128xf32>
    %272 = arith.mulf %4, %271 : vector<8x128xf32>
    %273 = arith.addf %269, %272 : vector<8x128xf32>
    %c13_129 = arith.constant 13 : index
    %274 = memref.load %arg5[%c13_129] : memref<16xf32, #tpu.memory_space<smem>>
    %275 = vector.broadcast %274 : f32 to vector<8x128xf32>
    %276 = arith.addf %273, %275 : vector<8x128xf32>
    %cst_130 = arith.constant 0.000000e+00 : f32
    %277 = vector.broadcast %cst_130 : f32 to vector<8x128xf32>
    %278 = arith.maximumf %276, %277 : vector<8x128xf32>
    %c0_131 = arith.constant 0 : index
    %c13_132 = arith.constant 13 : index
    %279 = memref.load %arg6[%c0_131, %c13_132] : memref<2x16xf32, #tpu.memory_space<smem>>
    %280 = vector.broadcast %279 : f32 to vector<8x128xf32>
    %281 = arith.mulf %278, %280 : vector<8x128xf32>
    %282 = arith.addf %262, %281 : vector<8x128xf32>
    %c1_133 = arith.constant 1 : index
    %c13_134 = arith.constant 13 : index
    %283 = memref.load %arg6[%c1_133, %c13_134] : memref<2x16xf32, #tpu.memory_space<smem>>
    %284 = vector.broadcast %283 : f32 to vector<8x128xf32>
    %285 = arith.mulf %278, %284 : vector<8x128xf32>
    %286 = arith.addf %266, %285 : vector<8x128xf32>
    %c14 = arith.constant 14 : index
    %c0_135 = arith.constant 0 : index
    %287 = memref.load %arg4[%c14, %c0_135] : memref<16x2xf32, #tpu.memory_space<smem>>
    %288 = vector.broadcast %287 : f32 to vector<8x128xf32>
    %289 = arith.mulf %2, %288 : vector<8x128xf32>
    %c14_136 = arith.constant 14 : index
    %c1_137 = arith.constant 1 : index
    %290 = memref.load %arg4[%c14_136, %c1_137] : memref<16x2xf32, #tpu.memory_space<smem>>
    %291 = vector.broadcast %290 : f32 to vector<8x128xf32>
    %292 = arith.mulf %4, %291 : vector<8x128xf32>
    %293 = arith.addf %289, %292 : vector<8x128xf32>
    %c14_138 = arith.constant 14 : index
    %294 = memref.load %arg5[%c14_138] : memref<16xf32, #tpu.memory_space<smem>>
    %295 = vector.broadcast %294 : f32 to vector<8x128xf32>
    %296 = arith.addf %293, %295 : vector<8x128xf32>
    %cst_139 = arith.constant 0.000000e+00 : f32
    %297 = vector.broadcast %cst_139 : f32 to vector<8x128xf32>
    %298 = arith.maximumf %296, %297 : vector<8x128xf32>
    %c0_140 = arith.constant 0 : index
    %c14_141 = arith.constant 14 : index
    %299 = memref.load %arg6[%c0_140, %c14_141] : memref<2x16xf32, #tpu.memory_space<smem>>
    %300 = vector.broadcast %299 : f32 to vector<8x128xf32>
    %301 = arith.mulf %298, %300 : vector<8x128xf32>
    %302 = arith.addf %282, %301 : vector<8x128xf32>
    %c1_142 = arith.constant 1 : index
    %c14_143 = arith.constant 14 : index
    %303 = memref.load %arg6[%c1_142, %c14_143] : memref<2x16xf32, #tpu.memory_space<smem>>
    %304 = vector.broadcast %303 : f32 to vector<8x128xf32>
    %305 = arith.mulf %298, %304 : vector<8x128xf32>
    %306 = arith.addf %286, %305 : vector<8x128xf32>
    %c15 = arith.constant 15 : index
    %c0_144 = arith.constant 0 : index
    %307 = memref.load %arg4[%c15, %c0_144] : memref<16x2xf32, #tpu.memory_space<smem>>
    %308 = vector.broadcast %307 : f32 to vector<8x128xf32>
    %309 = arith.mulf %2, %308 : vector<8x128xf32>
    %c15_145 = arith.constant 15 : index
    %c1_146 = arith.constant 1 : index
    %310 = memref.load %arg4[%c15_145, %c1_146] : memref<16x2xf32, #tpu.memory_space<smem>>
    %311 = vector.broadcast %310 : f32 to vector<8x128xf32>
    %312 = arith.mulf %4, %311 : vector<8x128xf32>
    %313 = arith.addf %309, %312 : vector<8x128xf32>
    %c15_147 = arith.constant 15 : index
    %314 = memref.load %arg5[%c15_147] : memref<16xf32, #tpu.memory_space<smem>>
    %315 = vector.broadcast %314 : f32 to vector<8x128xf32>
    %316 = arith.addf %313, %315 : vector<8x128xf32>
    %cst_148 = arith.constant 0.000000e+00 : f32
    %317 = vector.broadcast %cst_148 : f32 to vector<8x128xf32>
    %318 = arith.maximumf %316, %317 : vector<8x128xf32>
    %c0_149 = arith.constant 0 : index
    %c15_150 = arith.constant 15 : index
    %319 = memref.load %arg6[%c0_149, %c15_150] : memref<2x16xf32, #tpu.memory_space<smem>>
    %320 = vector.broadcast %319 : f32 to vector<8x128xf32>
    %321 = arith.mulf %318, %320 : vector<8x128xf32>
    %322 = arith.addf %302, %321 : vector<8x128xf32>
    %c1_151 = arith.constant 1 : index
    %c15_152 = arith.constant 15 : index
    %323 = memref.load %arg6[%c1_151, %c15_152] : memref<2x16xf32, #tpu.memory_space<smem>>
    %324 = vector.broadcast %323 : f32 to vector<8x128xf32>
    %325 = arith.mulf %318, %324 : vector<8x128xf32>
    %326 = arith.addf %306, %325 : vector<8x128xf32>
    %c0_153 = arith.constant 0 : index
    %327 = memref.load %arg7[%c0_153] : memref<2xf32, #tpu.memory_space<smem>>
    %328 = vector.broadcast %327 : f32 to vector<8x128xf32>
    %329 = arith.addf %322, %328 : vector<8x128xf32>
    %c1_154 = arith.constant 1 : index
    %330 = memref.load %arg7[%c1_154] : memref<2xf32, #tpu.memory_space<smem>>
    %331 = vector.broadcast %330 : f32 to vector<8x128xf32>
    %332 = arith.addf %326, %331 : vector<8x128xf32>
    %333 = tpu.iota {dimensions = array<i32: 1>} : vector<8x128xi32>
    %c2_i32 = arith.constant 2 : i32
    %c0_i32 = arith.constant 0 : i32
    %334 = arith.cmpi eq, %c2_i32, %c0_i32 : i32
    %c1_i32 = arith.constant 1 : i32
    %335 = arith.select %334, %c1_i32, %c2_i32 : i32
    %336 = vector.broadcast %335 : i32 to vector<8x128xi32>
    %337 = arith.remsi %333, %336 : vector<8x128xi32>
    %c0_i32_155 = arith.constant 0 : i32
    %338 = vector.broadcast %c0_i32_155 : i32 to vector<8x128xi32>
    %339 = arith.cmpi ne, %337, %338 : vector<8x128xi32>
    %c0_i32_156 = arith.constant 0 : i32
    %340 = vector.broadcast %c0_i32_156 : i32 to vector<8x128xi32>
    %341 = arith.cmpi slt, %337, %340 : vector<8x128xi32>
    %c0_i32_157 = arith.constant 0 : i32
    %342 = arith.cmpi slt, %335, %c0_i32_157 : i32
    %343 = vector.broadcast %342 : i1 to vector<8x128xi1>
    %344 = vector.broadcast %343 : vector<8x128xi1> to vector<8x128xi1>
    %345 = arith.xori %341, %344 : vector<8x128xi1>
    %346 = arith.andi %345, %339 : vector<8x128xi1>
    %347 = vector.broadcast %335 : i32 to vector<8x128xi32>
    %348 = arith.addi %337, %347 : vector<8x128xi32>
    %349 = arith.select %346, %348, %337 : vector<8x128xi1>, vector<8x128xi32>
    %c0_i32_158 = arith.constant 0 : i32
    %350 = vector.broadcast %c0_i32_158 : i32 to vector<8x128xi32>
    %351 = arith.cmpi eq, %349, %350 : vector<8x128xi32>
    %352 = arith.select %351, %329, %332 : vector<8x128xi1>, vector<8x128xf32>
    %c0_159 = arith.constant 0 : index
    %c0_160 = arith.constant 0 : index
    %353 = vector.load %arg8[%c0_159, %c0_160] : memref<8x128xf32, #tpu.memory_space<vmem>>, vector<8x128xf32>
    tpu.vector_store %arg8[%c0_159, %c0_160], %352 {strides = array<i32>} : memref<8x128xf32, #tpu.memory_space<vmem>>, vector<8x128xf32>,
    return
  }
  func.func @transform_0(%arg0: i32) -> (i32, i32) {
    %c0_i32 = arith.constant 0 : i32
    %c0_i32_0 = arith.constant 0 : i32
    return %arg0, %c0_i32 : i32, i32
  }
  func.func @transform_1(%arg0: i32) -> (i32, i32) {
    %c0_i32 = arith.constant 0 : i32
    %c0_i32_0 = arith.constant 0 : i32
    %c0_i32_1 = arith.constant 0 : i32
    return %c0_i32, %c0_i32_0 : i32, i32
  }
  func.func @transform_2(%arg0: i32) -> (i32, i32) {
    %c0_i32 = arith.constant 0 : i32
    %c0_i32_0 = arith.constant 0 : i32
    %c0_i32_1 = arith.constant 0 : i32
    return %c0_i32, %c0_i32_0 : i32, i32
  }
  func.func @transform_3(%arg0: i32) -> (i32, i32) {
    %c0_i32 = arith.constant 0 : i32
    %c0_i32_0 = arith.constant 0 : i32
    %c0_i32_1 = arith.constant 0 : i32
    return %c0_i32, %c0_i32_0 : i32, i32
  }
  func.func @transform_4(%arg0: i32) -> i32 {
    %c0_i32 = arith.constant 0 : i32
    %c0_i32_0 = arith.constant 0 : i32
    return %c0_i32 : i32
  }
  func.func @transform_5(%arg0: i32) -> (i32, i32) {
    %c0_i32 = arith.constant 0 : i32
    %c0_i32_0 = arith.constant 0 : i32
    %c0_i32_1 = arith.constant 0 : i32
    return %c0_i32, %c0_i32_0 : i32, i32
  }
  func.func @transform_6(%arg0: i32) -> i32 {
    %c0_i32 = arith.constant 0 : i32
    %c0_i32_0 = arith.constant 0 : i32
    return %c0_i32 : i32
  }
  func.func @transform_7(%arg0: i32) -> (i32, i32) {
    %c0_i32 = arith.constant 0 : i32
    %c0_i32_0 = arith.constant 0 : i32
    return %arg0, %c0_i32 : i32, i32
  }
}

</mosaic_0001>

<llo_original>
// kernel: generator_forward.1
$region0: #{generator_forward.1}
  #allocation0 [shape = 'u32[]', space=smem, size = 0x4, offset = 0x4, fixed_abs, tag = 'smem constant byte address 0x4 - core index']
  #allocation1 [shape = 'u32[144,128]{1,0:T(1,128)}', space=vmem, size = 0x12000, scoped, tag = 'internal scratch']
  %s0 = inlined_call_operand.vmem [shape: f32[8,128], index: 0, kind: input, shape index: {}]
  %s1 = inlined_call_operand.vmem [shape: f32[128,128], index: 1, kind: input, shape index: {}]
  %s2 = inlined_call_operand.vmem [shape: f32[128,128], index: 2, kind: input, shape index: {}]
  %s3 = inlined_call_operand.vmem [shape: f32[16,2], index: 3, kind: input, shape index: {}]
  %s4 = inlined_call_operand.vmem [shape: f32[16], index: 4, kind: input, shape index: {}]
  %s5 = inlined_call_operand.vmem [shape: f32[2,16], index: 5, kind: input, shape index: {}]
  %s6 = inlined_call_operand.vmem [shape: f32[2], index: 6, kind: input, shape index: {}]
  %s7 = inlined_call_operand.vmem [shape: f32[8,128], index: 7, kind: output, shape index: {}]
  %s8 = sld [smem:[#allocation0]]
  $region54: #{generator_forward.1} parent=0
    _
  %s10 = ssub.s32 1, %s8
  %s11 = scalar_select 0, %s10, %s8
  $region1: #{generator_forward.1} parent=0
    #allocation2 [shape = 'u8[8192]{0}', space=smem, size = 0x2000, scoped, tag = 'input window, operand 3, single buffered']
    #allocation3 [shape = 's32[1]{0}', space=sflag, size = 0x4, scoped, tag = 'scoped memory for generator_forward.1']
    #allocation4 [shape = 'u8[512]{0}', space=smem, size = 0x200, scoped, tag = 'input window, operand 4, single buffered']
    #allocation5 [shape = 's32[1]{0}', space=sflag, size = 0x4, scoped, tag = 'scoped memory for generator_forward.1']
    #allocation6 [shape = 'u8[1024]{0}', space=smem, size = 0x400, scoped, tag = 'input window, operand 5, single buffered']
    #allocation7 [shape = 'u8[512]{0}', space=smem, size = 0x200, scoped, tag = 'input window, operand 6, single buffered']
    #allocation8 [shape = 's32[1]{0}', space=sflag, size = 0x4, scoped, tag = 'scoped memory for generator_forward.1']
    %12 = vsyncpa [#allocation3], 0
    %13 = vsyncpa [#allocation5], 0
    %14 = vsyncpa [#allocation8], 0
    // Predicated region
    $region2: #{generator_forward.1} parent=1 // pred_check
      _
    $region3: #{generator_forward.1} parent=1 // pred_check_branch
      %16 = sbr.rel (0) target = $region5
    $region4: #{generator_forward.1} parent=1 // pred_region
      _
    $region5: #{generator_forward.1} parent=1 // pred_fallthru
      _
    // Predicated region
    $region6: #{generator_forward.1} parent=1 // pred_check
      _
    $region7: #{generator_forward.1} parent=1 // pred_check_branch
      %18 = sbr.rel (0) target = $region9
    $region8: #{generator_forward.1} parent=1 // pred_region
      _
    $region9: #{generator_forward.1} parent=1 // pred_fallthru
      _
    // Predicated region
    $region10: #{generator_forward.1} parent=1 // pred_check
      _
    $region11: #{generator_forward.1} parent=1 // pred_check_branch
      %20 = sbr.rel (0) target = $region13
    $region12: #{generator_forward.1} parent=1 // pred_region
      _
    $region13: #{generator_forward.1} parent=1 // pred_fallthru
      _
    // Predicated region
    $region14: #{generator_forward.1} parent=1 // pred_check
      _
    $region15: #{generator_forward.1} parent=1 // pred_check_branch
      %22 = sbr.rel (0) target = $region17
    $region16: #{generator_forward.1} parent=1 // pred_region
      %s24 = ssub.s32 256, 256
      %25 = vsyncadd [#allocation3], %s24
      %s26 = sshll.u32 %s3, 4
      %s27 = int_to_ptr.vmem [resolvable:$true] %s26
      %32 = dma.vmem_to_smem %s27, 256, [#allocation2], [#allocation3], 128, 128, 8
    $region17: #{generator_forward.1} parent=1 // pred_fallthru
      _
    // Predicated region
    $region18: #{generator_forward.1} parent=1 // pred_check
      _
    $region19: #{generator_forward.1} parent=1 // pred_check_branch
      %34 = sbr.rel (0) target = $region21
    $region20: #{generator_forward.1} parent=1 // pred_region
      %s36 = ssub.s32 16, 16
      %37 = vsyncadd [#allocation5], %s36
      %s39 = sshll.u32 %s4, 4
      %s40 = int_to_ptr.vmem [resolvable:$true] %s39
      %42 = dma.vmem_to_smem %s40, 16, [#allocation4], [#allocation5]
    $region21: #{generator_forward.1} parent=1 // pred_fallthru
      _
    // Predicated region
    $region22: #{generator_forward.1} parent=1 // pred_check
      _
    $region23: #{generator_forward.1} parent=1 // pred_check_branch
      %44 = sbr.rel (0) target = $region25
    $region24: #{generator_forward.1} parent=1 // pred_region
      %s46 = ssub.s32 32, 32
      %47 = vsyncadd [#allocation5], %s46
      %s49 = sshll.u32 %s5, 4
      %s50 = int_to_ptr.vmem [resolvable:$true] %s49
      %52 = dma.vmem_to_smem %s50, 32, [#allocation6], [#allocation5]
    $region25: #{generator_forward.1} parent=1 // pred_fallthru
      _
    // Predicated region
    $region26: #{generator_forward.1} parent=1 // pred_check
      _
    $region27: #{generator_forward.1} parent=1 // pred_check_branch
      %54 = sbr.rel (0) target = $region29
    $region28: #{generator_forward.1} parent=1 // pred_region
      %s56 = ssub.s32 16, 16
      %57 = vsyncadd [#allocation8], %s56
      %s59 = sshll.u32 %s6, 4
      %s60 = int_to_ptr.vmem [resolvable:$true] %s59
      %62 = dma.vmem_to_smem %s60, 16, [#allocation7], [#allocation8]
    $region29: #{generator_forward.1} parent=1 // pred_fallthru
      _
    // Predicated region
    $region30: #{generator_forward.1} parent=1 // pred_check
      _
    $region31: #{generator_forward.1} parent=1 // pred_check_branch
      %64 = sbr.rel (0) target = $region33
    $region32: #{generator_forward.1} parent=1 // pred_region
      %65 = dma.done [#allocation3], 256
    $region33: #{generator_forward.1} parent=1 // pred_fallthru
      _
    // Predicated region
    $region34: #{generator_forward.1} parent=1 // pred_check
      _
    $region35: #{generator_forward.1} parent=1 // pred_check_branch
      %67 = sbr.rel (0) target = $region37
    $region36: #{generator_forward.1} parent=1 // pred_region
      %68 = dma.done [#allocation5], 16
    $region37: #{generator_forward.1} parent=1 // pred_fallthru
      _
    // Predicated region
    $region38: #{generator_forward.1} parent=1 // pred_check
      _
    $region39: #{generator_forward.1} parent=1 // pred_check_branch
      %70 = sbr.rel (0) target = $region41
    $region40: #{generator_forward.1} parent=1 // pred_region
      %71 = dma.done [#allocation5], 32
    $region41: #{generator_forward.1} parent=1 // pred_fallthru
      _
    // Predicated region
    $region42: #{generator_forward.1} parent=1 // pred_check
      _
    $region43: #{generator_forward.1} parent=1 // pred_check_branch
      %73 = sbr.rel (0) target = $region45
    $region44: #{generator_forward.1} parent=1 // pred_region
      %74 = dma.done [#allocation8], 16
    $region45: #{generator_forward.1} parent=1 // pred_fallthru
      _
    %75 = sfence
    %v76 = vld [vmem:[%s0] sm:$0xff]
    %v77 = vld [vmem:[%s1] sm:$0xff]
    %v78 = vld [vmem:[%s1 + $0x8] sm:$0xff]
    %v79 = vld [vmem:[%s1 + $0x10] sm:$0xff]
    %v80 = vld [vmem:[%s1 + $0x18] sm:$0xff]
    %v81 = vld [vmem:[%s1 + $0x20] sm:$0xff]
    %v82 = vld [vmem:[%s1 + $0x28] sm:$0xff]
    %v83 = vld [vmem:[%s1 + $0x30] sm:$0xff]
    %v84 = vld [vmem:[%s1 + $0x38] sm:$0xff]
    %v85 = vld [vmem:[%s1 + $0x40] sm:$0xff]
    %v86 = vld [vmem:[%s1 + $0x48] sm:$0xff]
    %v87 = vld [vmem:[%s1 + $0x50] sm:$0xff]
    %v88 = vld [vmem:[%s1 + $0x58] sm:$0xff]
    %v89 = vld [vmem:[%s1 + $0x60] sm:$0xff]
    %v90 = vld [vmem:[%s1 + $0x68] sm:$0xff]
    %v91 = vld [vmem:[%s1 + $0x70] sm:$0xff]
    %v92 = vld [vmem:[%s1 + $0x78] sm:$0xff]
    %93 = vmatprep.subr.mxu0 0.0
    %94 = vmatpush1.msra.mxu0 %v77
    %95 = vmatprep.subr.mxu0 0.0
    %96 = vmatpush1.msra.mxu0 %v78
    %97 = vmatprep.subr.mxu0 0.0
    %98 = vmatpush1.msra.mxu0 %v79
    %99 = vmatprep.subr.mxu0 0.0
    %100 = vmatpush1.msra.mxu0 %v80
    %101 = vmatprep.subr.mxu0 0.0
    %102 = vmatpush1.msra.mxu0 %v81
    %103 = vmatprep.subr.mxu0 0.0
    %104 = vmatpush1.msra.mxu0 %v82
    %105 = vmatprep.subr.mxu0 0.0
    %106 = vmatpush1.msra.mxu0 %v83
    %107 = vmatprep.subr.mxu0 0.0
    %108 = vmatpush1.msra.mxu0 %v84
    %109 = vmatprep.subr.mxu0 0.0
    %110 = vmatpush1.msra.mxu0 %v85
    %111 = vmatprep.subr.mxu0 0.0
    %112 = vmatpush1.msra.mxu0 %v86
    %113 = vmatprep.subr.mxu0 0.0
    %114 = vmatpush1.msra.mxu0 %v87
    %115 = vmatprep.subr.mxu0 0.0
    %116 = vmatpush1.msra.mxu0 %v88
    %117 = vmatprep.subr.mxu0 0.0
    %118 = vmatpush1.msra.mxu0 %v89
    %119 = vmatprep.subr.mxu0 0.0
    %120 = vmatpush1.msra.mxu0 %v90
    %121 = vmatprep.subr.mxu0 0.0
    %122 = vmatpush1.msra.mxu0 %v91
    %123 = vmatprep.subr.mxu0 0.0
    %124 = vmatpush1.msra.mxu0 %v92
    %125 = vmatprep.subr.mxu0 0.0
    %126 = vmatpush1.msra.mxu0 0.0
    %127 = vmatprep.subr.mxu0 0.0
    %128 = vmatpush1.msra.mxu0 0.0
    %129 = vmatprep.subr.mxu0 0.0
    %130 = vmatpush1.msra.mxu0 0.0
    %131 = vmatprep.subr.mxu0 0.0
    %132 = vmatpush1.msra.mxu0 0.0
    %133 = vmatprep.subr.mxu0 0.0
    %134 = vmatpush1.msra.mxu0 0.0
    %135 = vmatprep.subr.mxu0 0.0
    %136 = vmatpush1.msra.mxu0 0.0
    %137 = vmatprep.subr.mxu0 0.0
    %138 = vmatpush1.msra.mxu0 0.0
    %139 = vmatprep.subr.mxu0 0.0
    %140 = vmatpush1.msra.mxu0 0.0
    %141 = vmatprep.subr.mxu0 0.0
    %142 = vmatpush1.msra.mxu0 0.0
    %143 = vmatprep.subr.mxu0 0.0
    %144 = vmatpush1.msra.mxu0 0.0
    %145 = vmatprep.subr.mxu0 0.0
    %146 = vmatpush1.msra.mxu0 0.0
    %147 = vmatprep.subr.mxu0 0.0
    %148 = vmatpush1.msra.mxu0 0.0
    %149 = vmatprep.subr.mxu0 0.0
    %150 = vmatpush1.msra.mxu0 0.0
    %151 = vmatprep.subr.mxu0 0.0
    %152 = vmatpush1.msra.mxu0 0.0
    %153 = vmatprep.subr.mxu0 0.0
    %154 = vmatpush1.msra.mxu0 0.0
    %155 = vmatprep.subr.mxu0 0.0
    %156 = vmatpush1.msra.mxu0 0.0
    %157 = vmatprep.mubr.f32.mxu0 0.0
    %158 = vmatmul.mubr.f32.gmra.mrb[0].mxu0 %v76
    %v159 = vpop.f32.mrb[0].mxu0
    %v160 = vadd.f32 0.0, %v159
    %v161 = vpop.f32.mrb[0].mxu0
    %162 = vdwg.mxu0
    %v163 = vld [vmem:[%s2] sm:$0xff]
    %v164 = vld [vmem:[%s2 + $0x8] sm:$0xff]
    %v165 = vld [vmem:[%s2 + $0x10] sm:$0xff]
    %v166 = vld [vmem:[%s2 + $0x18] sm:$0xff]
    %v167 = vld [vmem:[%s2 + $0x20] sm:$0xff]
    %v168 = vld [vmem:[%s2 + $0x28] sm:$0xff]
    %v169 = vld [vmem:[%s2 + $0x30] sm:$0xff]
    %v170 = vld [vmem:[%s2 + $0x38] sm:$0xff]
    %v171 = vld [vmem:[%s2 + $0x40] sm:$0xff]
    %v172 = vld [vmem:[%s2 + $0x48] sm:$0xff]
    %v173 = vld [vmem:[%s2 + $0x50] sm:$0xff]
    %v174 = vld [vmem:[%s2 + $0x58] sm:$0xff]
    %v175 = vld [vmem:[%s2 + $0x60] sm:$0xff]
    %v176 = vld [vmem:[%s2 + $0x68] sm:$0xff]
    %v177 = vld [vmem:[%s2 + $0x70] sm:$0xff]
    %v178 = vld [vmem:[%s2 + $0x78] sm:$0xff]
    %179 = vmatprep.subr.mxu0 0.0
    %180 = vmatpush1.msra.mxu0 %v163
    %181 = vmatprep.subr.mxu0 0.0
    %182 = vmatpush1.msra.mxu0 %v164
    %183 = vmatprep.subr.mxu0 0.0
    %184 = vmatpush1.msra.mxu0 %v165
    %185 = vmatprep.subr.mxu0 0.0
    %186 = vmatpush1.msra.mxu0 %v166
    %187 = vmatprep.subr.mxu0 0.0
    %188 = vmatpush1.msra.mxu0 %v167
    %189 = vmatprep.subr.mxu0 0.0
    %190 = vmatpush1.msra.mxu0 %v168
    %191 = vmatprep.subr.mxu0 0.0
    %192 = vmatpush1.msra.mxu0 %v169
    %193 = vmatprep.subr.mxu0 0.0
    %194 = vmatpush1.msra.mxu0 %v170
    %195 = vmatprep.subr.mxu0 0.0
    %196 = vmatpush1.msra.mxu0 %v171
    %197 = vmatprep.subr.mxu0 0.0
    %198 = vmatpush1.msra.mxu0 %v172
    %199 = vmatprep.subr.mxu0 0.0
    %200 = vmatpush1.msra.mxu0 %v173
    %201 = vmatprep.subr.mxu0 0.0
    %202 = vmatpush1.msra.mxu0 %v174
    %203 = vmatprep.subr.mxu0 0.0
    %204 = vmatpush1.msra.mxu0 %v175
    %205 = vmatprep.subr.mxu0 0.0
    %206 = vmatpush1.msra.mxu0 %v176
    %207 = vmatprep.subr.mxu0 0.0
    %208 = vmatpush1.msra.mxu0 %v177
    %209 = vmatprep.subr.mxu0 0.0
    %210 = vmatpush1.msra.mxu0 %v178
    %211 = vmatprep.subr.mxu0 0.0
    %212 = vmatpush1.msra.mxu0 0.0
    %213 = vmatprep.subr.mxu0 0.0
    %214 = vmatpush1.msra.mxu0 0.0
    %215 = vmatprep.subr.mxu0 0.0
    %216 = vmatpush1.msra.mxu0 0.0
    %217 = vmatprep.subr.mxu0 0.0
    %218 = vmatpush1.msra.mxu0 0.0
    %219 = vmatprep.subr.mxu0 0.0
    %220 = vmatpush1.msra.mxu0 0.0
    %221 = vmatprep.subr.mxu0 0.0
    %222 = vmatpush1.msra.mxu0 0.0
    %223 = vmatprep.subr.mxu0 0.0
    %224 = vmatpush1.msra.mxu0 0.0
    %225 = vmatprep.subr.mxu0 0.0
    %226 = vmatpush1.msra.mxu0 0.0
    %227 = vmatprep.subr.mxu0 0.0
    %228 = vmatpush1.msra.mxu0 0.0
    %229 = vmatprep.subr.mxu0 0.0
    %230 = vmatpush1.msra.mxu0 0.0
    %231 = vmatprep.subr.mxu0 0.0
    %232 = vmatpush1.msra.mxu0 0.0
    %233 = vmatprep.subr.mxu0 0.0
    %234 = vmatpush1.msra.mxu0 0.0
    %235 = vmatprep.subr.mxu0 0.0
    %236 = vmatpush1.msra.mxu0 0.0
    %237 = vmatprep.subr.mxu0 0.0
    %238 = vmatpush1.msra.mxu0 0.0
    %239 = vmatprep.subr.mxu0 0.0
    %240 = vmatpush1.msra.mxu0 0.0
    %241 = vmatprep.subr.mxu0 0.0
    %242 = vmatpush1.msra.mxu0 0.0
    %243 = vmatprep.mubr.f32.mxu0 0.0
    %244 = vmatmul.mubr.f32.gmra.mrb[0].mxu0 %v76
    %v245 = vpop.f32.mrb[0].mxu0
    %v246 = vadd.f32 0.0, %v245
    %v247 = vpop.f32.mrb[0].mxu0
    %248 = vdwg.mxu0
    %s249 = sld [smem:[#allocation2]]
    %v250 = vstv %s249
    %v251 = vmul.f32 %v160, %v250
    %s252 = sld [smem:[#allocation2 + $0x1]]
    %v253 = vstv %s252
    %v254 = vmul.f32 %v246, %v253
    %v255 = vadd.f32 %v251, %v254
    %s256 = sld [smem:[#allocation4]]
    %v257 = vstv %s256
    %v258 = vadd.f32 %v255, %v257
    %v259 = vmax.f32 %v258, 0.0
    %s260 = sld [smem:[#allocation6]]
    %v261 = vstv %s260
    %v262 = vmul.f32 %v259, %v261
    %v263 = vadd.f32 %v262, 0.0
    %s264 = sld [smem:[#allocation6 + $0x80]]
    %v265 = vstv %s264
    %v266 = vmul.f32 %v259, %v265
    %v267 = vadd.f32 %v266, 0.0
    %s268 = sld [smem:[#allocation2 + $0x80]]
    %v269 = vstv %s268
    %v270 = vmul.f32 %v160, %v269
    %s271 = sld [smem:[#allocation2 + $0x81]]
    %v272 = vstv %s271
    %v273 = vmul.f32 %v246, %v272
    %v274 = vadd.f32 %v270, %v273
    %s275 = sld [smem:[#allocation4 + $0x1]]
    %v276 = vstv %s275
    %v277 = vadd.f32 %v274, %v276
    %v278 = vmax.f32 %v277, 0.0
    %s279 = sld [smem:[#allocation6 + $0x1]]
    %v280 = vstv %s279
    %v281 = vmul.f32 %v278, %v280
    %v282 = vadd.f32 %v263, %v281
    %s283 = sld [smem:[#allocation6 + $0x81]]
    %v284 = vstv %s283
    %v285 = vmul.f32 %v278, %v284
    %v286 = vadd.f32 %v267, %v285
    %s287 = sld [smem:[#allocation2 + $0x100]]
    %v288 = vstv %s287
    %v289 = vmul.f32 %v160, %v288
    %s290 = sld [smem:[#allocation2 + $0x101]]
    %v291 = vstv %s290
    %v292 = vmul.f32 %v246, %v291
    %v293 = vadd.f32 %v289, %v292
    %s294 = sld [smem:[#allocation4 + $0x2]]
    %v295 = vstv %s294
    %v296 = vadd.f32 %v293, %v295
    %v297 = vmax.f32 %v296, 0.0
    %s298 = sld [smem:[#allocation6 + $0x2]]
    %v299 = vstv %s298
    %v300 = vmul.f32 %v297, %v299
    %v301 = vadd.f32 %v282, %v300
    %s302 = sld [smem:[#allocation6 + $0x82]]
    %v303 = vstv %s302
    %v304 = vmul.f32 %v297, %v303
    %v305 = vadd.f32 %v286, %v304
    %s306 = sld [smem:[#allocation2 + $0x180]]
    %v307 = vstv %s306
    %v308 = vmul.f32 %v160, %v307
    %s309 = sld [smem:[#allocation2 + $0x181]]
    %v310 = vstv %s309
    %v311 = vmul.f32 %v246, %v310
    %v312 = vadd.f32 %v308, %v311
    %s313 = sld [smem:[#allocation4 + $0x3]]
    %v314 = vstv %s313
    %v315 = vadd.f32 %v312, %v314
    %v316 = vmax.f32 %v315, 0.0
    %s317 = sld [smem:[#allocation6 + $0x3]]
    %v318 = vstv %s317
    %v319 = vmul.f32 %v316, %v318
    %v320 = vadd.f32 %v301, %v319
    %s321 = sld [smem:[#allocation6 + $0x83]]
    %v322 = vstv %s321
    %v323 = vmul.f32 %v316, %v322
    %v324 = vadd.f32 %v305, %v323
    %s325 = sld [smem:[#allocation2 + $0x200]]
    %v326 = vstv %s325
    %v327 = vmul.f32 %v160, %v326
    %s328 = sld [smem:[#allocation2 + $0x201]]
    %v329 = vstv %s328
    %v330 = vmul.f32 %v246, %v329
    %v331 = vadd.f32 %v327, %v330
    %s332 = sld [smem:[#allocation4 + $0x4]]
    %v333 = vstv %s332
    %v334 = vadd.f32 %v331, %v333
    %v335 = vmax.f32 %v334, 0.0
    %s336 = sld [smem:[#allocation6 + $0x4]]
    %v337 = vstv %s336
    %v338 = vmul.f32 %v335, %v337
    %v339 = vadd.f32 %v320, %v338
    %s340 = sld [smem:[#allocation6 + $0x84]]
    %v341 = vstv %s340
    %v342 = vmul.f32 %v335, %v341
    %v343 = vadd.f32 %v324, %v342
    %s344 = sld [smem:[#allocation2 + $0x280]]
    %v345 = vstv %s344
    %v346 = vmul.f32 %v160, %v345
    %s347 = sld [smem:[#allocation2 + $0x281]]
    %v348 = vstv %s347
    %v349 = vmul.f32 %v246, %v348
    %v350 = vadd.f32 %v346, %v349
    %s351 = sld [smem:[#allocation4 + $0x5]]
    %v352 = vstv %s351
    %v353 = vadd.f32 %v350, %v352
    %v354 = vmax.f32 %v353, 0.0
    %s355 = sld [smem:[#allocation6 + $0x5]]
    %v356 = vstv %s355
    %v357 = vmul.f32 %v354, %v356
    %v358 = vadd.f32 %v339, %v357
    %s359 = sld [smem:[#allocation6 + $0x85]]
    %v360 = vstv %s359
    %v361 = vmul.f32 %v354, %v360
    %v362 = vadd.f32 %v343, %v361
    %s363 = sld [smem:[#allocation2 + $0x300]]
    %v364 = vstv %s363
    %v365 = vmul.f32 %v160, %v364
    %s366 = sld [smem:[#allocation2 + $0x301]]
    %v367 = vstv %s366
    %v368 = vmul.f32 %v246, %v367
    %v369 = vadd.f32 %v365, %v368
    %s370 = sld [smem:[#allocation4 + $0x6]]
    %v371 = vstv %s370
    %v372 = vadd.f32 %v369, %v371
    %v373 = vmax.f32 %v372, 0.0
    %s374 = sld [smem:[#allocation6 + $0x6]]
    %v375 = vstv %s374
    %v376 = vmul.f32 %v373, %v375
    %v377 = vadd.f32 %v358, %v376
    %s378 = sld [smem:[#allocation6 + $0x86]]
    %v379 = vstv %s378
    %v380 = vmul.f32 %v373, %v379
    %v381 = vadd.f32 %v362, %v380
    %s382 = sld [smem:[#allocation2 + $0x380]]
    %v383 = vstv %s382
    %v384 = vmul.f32 %v160, %v383
    %s385 = sld [smem:[#allocation2 + $0x381]]
    %v386 = vstv %s385
    %v387 = vmul.f32 %v246, %v386
    %v388 = vadd.f32 %v384, %v387
    %s389 = sld [smem:[#allocation4 + $0x7]]
    %v390 = vstv %s389
    %v391 = vadd.f32 %v388, %v390
    %v392 = vmax.f32 %v391, 0.0
    %s393 = sld [smem:[#allocation6 + $0x7]]
    %v394 = vstv %s393
    %v395 = vmul.f32 %v392, %v394
    %v396 = vadd.f32 %v377, %v395
    %s397 = sld [smem:[#allocation6 + $0x87]]
    %v398 = vstv %s397
    %v399 = vmul.f32 %v392, %v398
    %v400 = vadd.f32 %v381, %v399
    %s401 = sld [smem:[#allocation2 + $0x400]]
    %v402 = vstv %s401
    %v403 = vmul.f32 %v160, %v402
    %s404 = sld [smem:[#allocation2 + $0x401]]
    %v405 = vstv %s404
    %v406 = vmul.f32 %v246, %v405
    %v407 = vadd.f32 %v403, %v406
    %s408 = sld [smem:[#allocation4 + $0x8]]
    %v409 = vstv %s408
    %v410 = vadd.f32 %v407, %v409
    %v411 = vmax.f32 %v410, 0.0
    %s412 = sld [smem:[#allocation6 + $0x8]]
    %v413 = vstv %s412
    %v414 = vmul.f32 %v411, %v413
    %v415 = vadd.f32 %v396, %v414
    %s416 = sld [smem:[#allocation6 + $0x88]]
    %v417 = vstv %s416
    %v418 = vmul.f32 %v411, %v417
    %v419 = vadd.f32 %v400, %v418
    %s420 = sld [smem:[#allocation2 + $0x480]]
    %v421 = vstv %s420
    %v422 = vmul.f32 %v160, %v421
    %s423 = sld [smem:[#allocation2 + $0x481]]
    %v424 = vstv %s423
    %v425 = vmul.f32 %v246, %v424
    %v426 = vadd.f32 %v422, %v425
    %s427 = sld [smem:[#allocation4 + $0x9]]
    %v428 = vstv %s427
    %v429 = vadd.f32 %v426, %v428
    %v430 = vmax.f32 %v429, 0.0
    %s431 = sld [smem:[#allocation6 + $0x9]]
    %v432 = vstv %s431
    %v433 = vmul.f32 %v430, %v432
    %v434 = vadd.f32 %v415, %v433
    %s435 = sld [smem:[#allocation6 + $0x89]]
    %v436 = vstv %s435
    %v437 = vmul.f32 %v430, %v436
    %v438 = vadd.f32 %v419, %v437
    %s439 = sld [smem:[#allocation2 + $0x500]]
    %v440 = vstv %s439
    %v441 = vmul.f32 %v160, %v440
    %s442 = sld [smem:[#allocation2 + $0x501]]
    %v443 = vstv %s442
    %v444 = vmul.f32 %v246, %v443
    %v445 = vadd.f32 %v441, %v444
    %s446 = sld [smem:[#allocation4 + $0xa]]
    %v447 = vstv %s446
    %v448 = vadd.f32 %v445, %v447
    %v449 = vmax.f32 %v448, 0.0
    %s450 = sld [smem:[#allocation6 + $0xa]]
    %v451 = vstv %s450
    %v452 = vmul.f32 %v449, %v451
    %v453 = vadd.f32 %v434, %v452
    %s454 = sld [smem:[#allocation6 + $0x8a]]
    %v455 = vstv %s454
    %v456 = vmul.f32 %v449, %v455
    %v457 = vadd.f32 %v438, %v456
    %s458 = sld [smem:[#allocation2 + $0x580]]
    %v459 = vstv %s458
    %v460 = vmul.f32 %v160, %v459
    %s461 = sld [smem:[#allocation2 + $0x581]]
    %v462 = vstv %s461
    %v463 = vmul.f32 %v246, %v462
    %v464 = vadd.f32 %v460, %v463
    %s465 = sld [smem:[#allocation4 + $0xb]]
    %v466 = vstv %s465
    %v467 = vadd.f32 %v464, %v466
    %v468 = vmax.f32 %v467, 0.0
    %s469 = sld [smem:[#allocation6 + $0xb]]
    %v470 = vstv %s469
    %v471 = vmul.f32 %v468, %v470
    %v472 = vadd.f32 %v453, %v471
    %s473 = sld [smem:[#allocation6 + $0x8b]]
    %v474 = vstv %s473
    %v475 = vmul.f32 %v468, %v474
    %v476 = vadd.f32 %v457, %v475
    %s477 = sld [smem:[#allocation2 + $0x600]]
    %v478 = vstv %s477
    %v479 = vmul.f32 %v160, %v478
    %s480 = sld [smem:[#allocation2 + $0x601]]
    %v481 = vstv %s480
    %v482 = vmul.f32 %v246, %v481
    %v483 = vadd.f32 %v479, %v482
    %s484 = sld [smem:[#allocation4 + $0xc]]
    %v485 = vstv %s484
    %v486 = vadd.f32 %v483, %v485
    %v487 = vmax.f32 %v486, 0.0
    %s488 = sld [smem:[#allocation6 + $0xc]]
    %v489 = vstv %s488
    %v490 = vmul.f32 %v487, %v489
    %v491 = vadd.f32 %v472, %v490
    %s492 = sld [smem:[#allocation6 + $0x8c]]
    %v493 = vstv %s492
    %v494 = vmul.f32 %v487, %v493
    %v495 = vadd.f32 %v476, %v494
    %s496 = sld [smem:[#allocation2 + $0x680]]
    %v497 = vstv %s496
    %v498 = vmul.f32 %v160, %v497
    %s499 = sld [smem:[#allocation2 + $0x681]]
    %v500 = vstv %s499
    %v501 = vmul.f32 %v246, %v500
    %v502 = vadd.f32 %v498, %v501
    %s503 = sld [smem:[#allocation4 + $0xd]]
    %v504 = vstv %s503
    %v505 = vadd.f32 %v502, %v504
    %v506 = vmax.f32 %v505, 0.0
    %s507 = sld [smem:[#allocation6 + $0xd]]
    %v508 = vstv %s507
    %v509 = vmul.f32 %v506, %v508
    %v510 = vadd.f32 %v491, %v509
    %s511 = sld [smem:[#allocation6 + $0x8d]]
    %v512 = vstv %s511
    %v513 = vmul.f32 %v506, %v512
    %v514 = vadd.f32 %v495, %v513
    %s515 = sld [smem:[#allocation2 + $0x700]]
    %v516 = vstv %s515
    %v517 = vmul.f32 %v160, %v516
    %s518 = sld [smem:[#allocation2 + $0x701]]
    %v519 = vstv %s518
    %v520 = vmul.f32 %v246, %v519
    %v521 = vadd.f32 %v517, %v520
    %s522 = sld [smem:[#allocation4 + $0xe]]
    %v523 = vstv %s522
    %v524 = vadd.f32 %v521, %v523
    %v525 = vmax.f32 %v524, 0.0
    %s526 = sld [smem:[#allocation6 + $0xe]]
    %v527 = vstv %s526
    %v528 = vmul.f32 %v525, %v527
    %v529 = vadd.f32 %v510, %v528
    %s530 = sld [smem:[#allocation6 + $0x8e]]
    %v531 = vstv %s530
    %v532 = vmul.f32 %v525, %v531
    %v533 = vadd.f32 %v514, %v532
    %s534 = sld [smem:[#allocation2 + $0x780]]
    %v535 = vstv %s534
    %v536 = vmul.f32 %v160, %v535
    %s537 = sld [smem:[#allocation2 + $0x781]]
    %v538 = vstv %s537
    %v539 = vmul.f32 %v246, %v538
    %v540 = vadd.f32 %v536, %v539
    %s541 = sld [smem:[#allocation4 + $0xf]]
    %v542 = vstv %s541
    %v543 = vadd.f32 %v540, %v542
    %v544 = vmax.f32 %v543, 0.0
    %s545 = sld [smem:[#allocation6 + $0xf]]
    %v546 = vstv %s545
    %v547 = vmul.f32 %v544, %v546
    %v548 = vadd.f32 %v529, %v547
    %s549 = sld [smem:[#allocation6 + $0x8f]]
    %v550 = vstv %s549
    %v551 = vmul.f32 %v544, %v550
    %v552 = vadd.f32 %v533, %v551
    %s553 = sld [smem:[#allocation7]]
    %v554 = vstv %s553
    %v555 = vadd.f32 %v548, %v554
    %s556 = sld [smem:[#allocation7 + $0x1]]
    %v557 = vstv %s556
    %v558 = vadd.f32 %v552, %v557
    %v559 = vlaneseq
    %v560 = vand.u32 %v559, 127
    %vm561 = vcmp.lt.s32.totalorder %v560, 0
    %v562 = vsub.s32 0, %v560
    %v563 = vsel %vm561, %v562, %v560
    %v564 = vshrl.u32 %v563, 1
    %v565 = vand.u32 %v563, 1
    %v566 = vsub.s32 0, %v565
    %v567 = vsel %vm561, %v566, %v565
    %vm568 = vcmp.ne.s32.totalorder %v567, 0
    %vm569 = vcmp.lt.s32.totalorder %v567, 0
    %vm570 = vmand %vm569, %vm568
    %v571 = vadd.s32 %v567, 2
    %v572 = vsel %vm570, %v571, %v567
    %vm573 = vcmp.eq.s32.totalorder %v572, 0
    %v574 = vsel %vm573, %v555, %v558
    %575 = vst [vmem:[%s7] sm:$0xff] %v574
    // Predicated region
    $region46: #{generator_forward.1} parent=1 // pred_check
      _
    $region47: #{generator_forward.1} parent=1 // pred_check_branch
      %577 = sbr.rel (0) target = $region49
    $region48: #{generator_forward.1} parent=1 // pred_region
      _
    $region49: #{generator_forward.1} parent=1 // pred_fallthru
      _
    // Predicated region
    $region50: #{generator_forward.1} parent=1 // pred_check
      _
    $region51: #{generator_forward.1} parent=1 // pred_check_branch
      %579 = sbr.rel (0) target = $region53
    $region52: #{generator_forward.1} parent=1 // pred_region
      _
    $region53: #{generator_forward.1} parent=1 // pred_fallthru
      _
    %580 = vsyncpa [#allocation3], 1
    %581 = vsyncpa [#allocation5], 1
    %582 = vsyncpa [#allocation8], 1

</llo_original>
